<compile_context>
chip_gen: v6e
topology: v6e:2x2x1
jax: 0.10.0
libtpu: 0.0.40
codegen_flags: <defaults>
</compile_context>

<pallas_src>
import jax
import jax.numpy as jnp
from jax.experimental import pallas as pl
from jax.experimental.pallas import tpu as pltpu  # noqa: F401  (TPU namespace, kept for clarity)

P_DROP = 0.3
SCALE = 1.0 / 0.0625  # div(0.0625) == mul by 16
INV_KEEP = 1.0 / (1.0 - P_DROP)


def _sdpa_dropout_kernel(q_ref, k_ref, v_ref, rnd_ref, o_ref):
    # All refs hold the full problem: q/k/v: (BH, S, D), rnd: (BH, S, S), o: (BH, S, D)
    q = q_ref[...]
    k = k_ref[...]
    v = v_ref[...]
    rnd = rnd_ref[...]  # uniform [0, 1) float32

    # v1 / v2: scaled scores; contraction over last dims (no materialized transpose).
    s = jnp.einsum(
        "bqd,bkd->bqk", q, k, preferred_element_type=jnp.float32
    ) * SCALE                                                  # (BH, S, S) f32

    # v3 (unnormalized part of softmax, numerically stable)
    m = jnp.max(s, axis=-1, keepdims=True)
    e = jnp.exp(s - m)                                         # (BH, S, S)
    denom = jnp.sum(e, axis=-1, keepdims=True)                 # (BH, S, 1)

    # v4: dropout keep-mask applied to the unnormalized weights.
    keep = rnd >= P_DROP                                       # P(keep) = 1 - p
    e_kept = jnp.where(keep, e, 0.0)

    # v5: PV matmul, then fold softmax normalization + dropout 1/(1-p) into one
    # per-row scale (exactly equivalent: the scale is constant along k).
    out = jnp.einsum(
        "bqk,bkd->bqd", e_kept.astype(v.dtype), v, preferred_element_type=jnp.float32
    )                                                          # (BH, S, D) f32
    row_scale = INV_KEEP / denom                               # (BH, S, 1)
    o_ref[...] = (out * row_scale).astype(o_ref.dtype)


@jax.jit
def sdpa_dropout(x1, x2, x3, dropout_key):
    B, H, S, D = x1.shape
    BH = B * H
    q = x1.reshape(BH, S, D)
    k = x2.reshape(BH, S, D)
    v = x3.reshape(BH, S, D)

    # Dropout randomness generated host-side (portable across TPU + interpret).
    rnd = jax.random.uniform(dropout_key, (BH, S, S), dtype=jnp.float32)

    out = pl.pallas_call(
        _sdpa_dropout_kernel,
        out_shape=jax.ShapeDtypeStruct((BH, S, D), x1.dtype),
        grid=(1,),  # single step: whole problem fits in VMEM; no per-head step overhead
        in_specs=[
            pl.BlockSpec((BH, S, D), lambda i: (0, 0, 0)),
            pl.BlockSpec((BH, S, D), lambda i: (0, 0, 0)),
            pl.BlockSpec((BH, S, D), lambda i: (0, 0, 0)),
            pl.BlockSpec((BH, S, S), lambda i: (0, 0, 0)),
        ],
        out_specs=pl.BlockSpec((BH, S, D), lambda i: (0, 0, 0)),
    )(q, k, v, rnd)
    return out.reshape(B, H, S, D)


if __name__ == "__main__":
    key = jax.random.PRNGKey(0)
    k1, k2, k3, kdrop = jax.random.split(key, 4)

    B, H, S, D = 2, 4, 8, 16
    x1 = jax.random.normal(k1, (B, H, S, D), dtype=jnp.float32)
    x2 = jax.random.normal(k2, (B, H, S, D), dtype=jnp.float32)
    x3 = jax.random.normal(k3, (B, H, S, D), dtype=jnp.float32)

    out = sdpa_dropout(x1, x2, x3, kdrop)
    jax.block_until_ready(out)

    assert out.shape == (B, H, S, D)
    assert bool(jnp.isfinite(out).all())
    print("KERNEL_OK")
</pallas_src>

<mosaic_0001>
module attributes {stable_mosaic.version = 11 : i64} {
  func.func @_sdpa_dropout_kernel(%arg0: i32, %arg1: memref<8x8x16xf32, #tpu.memory_space<vmem>>, %arg2: memref<8x8x16xf32, #tpu.memory_space<vmem>>, %arg3: memref<8x8x16xf32, #tpu.memory_space<vmem>>, %arg4: memref<8x8x8xf32, #tpu.memory_space<vmem>>, %arg5: memref<8x8x16xf32, #tpu.memory_space<vmem>>) attributes {dimension_semantics = [#tpu.dimension_semantics<arbitrary>], iteration_bounds = array<i64: 1>, scalar_prefetch = 0 : i64, scratch_operands = 0 : i64, tpu.core_type = #tpu.core_type<tc>, window_params = [{pipeline_mode = #tpu.pipeline_mode<synchronous>, transform_indices = @transform_0, window_bounds = array<i64: 8, 8, 16>}, {pipeline_mode = #tpu.pipeline_mode<synchronous>, transform_indices = @transform_1, window_bounds = array<i64: 8, 8, 16>}, {pipeline_mode = #tpu.pipeline_mode<synchronous>, transform_indices = @transform_2, window_bounds = array<i64: 8, 8, 16>}, {pipeline_mode = #tpu.pipeline_mode<synchronous>, transform_indices = @transform_3, window_bounds = array<i64: 8, 8, 8>}, {pipeline_mode = #tpu.pipeline_mode<synchronous>, transform_indices = @transform_4, window_bounds = array<i64: 8, 8, 16>}]} {
    %c0 = arith.constant 0 : index
    %c0_0 = arith.constant 0 : index
    %c0_1 = arith.constant 0 : index
    %0 = vector.load %arg1[%c0, %c0_0, %c0_1] : memref<8x8x16xf32, #tpu.memory_space<vmem>>, vector<8x8x16xf32>
    %c0_2 = arith.constant 0 : index
    %c0_3 = arith.constant 0 : index
    %c0_4 = arith.constant 0 : index
    %1 = vector.load %arg2[%c0_2, %c0_3, %c0_4] : memref<8x8x16xf32, #tpu.memory_space<vmem>>, vector<8x8x16xf32>
    %c0_5 = arith.constant 0 : index
    %c0_6 = arith.constant 0 : index
    %c0_7 = arith.constant 0 : index
    %2 = vector.load %arg3[%c0_5, %c0_6, %c0_7] : memref<8x8x16xf32, #tpu.memory_space<vmem>>, vector<8x8x16xf32>
    %c0_8 = arith.constant 0 : index
    %c0_9 = arith.constant 0 : index
    %c0_10 = arith.constant 0 : index
    %3 = vector.load %arg4[%c0_8, %c0_9, %c0_10] : memref<8x8x8xf32, #tpu.memory_space<vmem>>, vector<8x8x8xf32>
    "tpu.trace_start"() <{level = 10 : i32, message = "bqd,bkd->bqk"}> : () -> ()
    %cst = arith.constant dense<0.000000e+00> : vector<8x8x8xf32>
    %4 = tpu.matmul %0, %1, %cst {dimension_numbers = #tpu.dot_dimension_numbers<[2], [2], [1], [1], [0, 0, 0, 1, 1, 1], [0], [0]>} : vector<8x8x16xf32>, vector<8x8x16xf32>, vector<8x8x8xf32> -> vector<8x8x8xf32>
    "tpu.trace_stop"() : () -> ()
    %cst_11 = arith.constant 1.600000e+01 : f32
    %5 = vector.broadcast %cst_11 : f32 to vector<8x8x8xf32>
    %6 = arith.mulf %4, %5 : vector<8x8x8xf32>
    %cst_12 = arith.constant dense<0xFF800000> : vector<8x8xf32>
    %7 = vector.multi_reduction <maximumf>, %6, %cst_12 [2] : vector<8x8x8xf32> to vector<8x8xf32>
    %8 = vector.shape_cast %7 : vector<8x8xf32> to vector<8x8x1xf32>
    %9 = vector.broadcast %8 : vector<8x8x1xf32> to vector<8x8x8xf32>
    %10 = arith.subf %6, %9 : vector<8x8x8xf32>
    %11 = math.exp %10 : vector<8x8x8xf32>
    %cst_13 = arith.constant dense<0.000000e+00> : vector<8x8xf32>
    %12 = vector.multi_reduction <add>, %11, %cst_13 [2] : vector<8x8x8xf32> to vector<8x8xf32>
    %13 = vector.shape_cast %12 : vector<8x8xf32> to vector<8x8x1xf32>
    %cst_14 = arith.constant 3.000000e-01 : f32
    %14 = vector.broadcast %cst_14 : f32 to vector<8x8x8xf32>
    %15 = arith.cmpf oge, %3, %14 : vector<8x8x8xf32>
    %cst_15 = arith.constant 0.000000e+00 : f32
    %16 = vector.broadcast %cst_15 : f32 to vector<8x8x8xf32>
    %17 = arith.select %15, %11, %16 : vector<8x8x8xi1>, vector<8x8x8xf32>
    "tpu.trace_start"() <{level = 10 : i32, message = "bqk,bkd->bqd"}> : () -> ()
    %cst_16 = arith.constant dense<0.000000e+00> : vector<8x8x16xf32>
    %18 = tpu.matmul %17, %2, %cst_16 {dimension_numbers = #tpu.dot_dimension_numbers<[2], [1], [1], [2], [0, 0, 0, 1, 1, 2], [0], [0]>} : vector<8x8x8xf32>, vector<8x8x16xf32>, vector<8x8x16xf32> -> vector<8x8x16xf32>
    "tpu.trace_stop"() : () -> ()
    %cst_17 = arith.constant 1.42857146 : f32
    %19 = vector.broadcast %cst_17 : f32 to vector<8x8x1xf32>
    %20 = arith.divf %19, %13 : vector<8x8x1xf32>
    %21 = vector.broadcast %20 : vector<8x8x1xf32> to vector<8x8x16xf32>
    %22 = arith.mulf %18, %21 : vector<8x8x16xf32>
    %c0_18 = arith.constant 0 : index
    %c0_19 = arith.constant 0 : index
    %c0_20 = arith.constant 0 : index
    %23 = vector.load %arg5[%c0_18, %c0_19, %c0_20] : memref<8x8x16xf32, #tpu.memory_space<vmem>>, vector<8x8x16xf32>
    tpu.vector_store %arg5[%c0_18, %c0_19, %c0_20], %22 {strides = array<i32>} : memref<8x8x16xf32, #tpu.memory_space<vmem>>, vector<8x8x16xf32>,
    return
  }
  func.func @transform_0(%arg0: i32) -> (i32, i32, i32) {
    %c0_i32 = arith.constant 0 : i32
    %c0_i32_0 = arith.constant 0 : i32
    %c0_i32_1 = arith.constant 0 : i32
    %c0_i32_2 = arith.constant 0 : i32
    return %c0_i32, %c0_i32_0, %c0_i32_1 : i32, i32, i32
  }
  func.func @transform_1(%arg0: i32) -> (i32, i32, i32) {
    %c0_i32 = arith.constant 0 : i32
    %c0_i32_0 = arith.constant 0 : i32
    %c0_i32_1 = arith.constant 0 : i32
    %c0_i32_2 = arith.constant 0 : i32
    return %c0_i32, %c0_i32_0, %c0_i32_1 : i32, i32, i32
  }
  func.func @transform_2(%arg0: i32) -> (i32, i32, i32) {
    %c0_i32 = arith.constant 0 : i32
    %c0_i32_0 = arith.constant 0 : i32
    %c0_i32_1 = arith.constant 0 : i32
    %c0_i32_2 = arith.constant 0 : i32
    return %c0_i32, %c0_i32_0, %c0_i32_1 : i32, i32, i32
  }
  func.func @transform_3(%arg0: i32) -> (i32, i32, i32) {
    %c0_i32 = arith.constant 0 : i32
    %c0_i32_0 = arith.constant 0 : i32
    %c0_i32_1 = arith.constant 0 : i32
    %c0_i32_2 = arith.constant 0 : i32
    return %c0_i32, %c0_i32_0, %c0_i32_1 : i32, i32, i32
  }
  func.func @transform_4(%arg0: i32) -> (i32, i32, i32) {
    %c0_i32 = arith.constant 0 : i32
    %c0_i32_0 = arith.constant 0 : i32
    %c0_i32_1 = arith.constant 0 : i32
    %c0_i32_2 = arith.constant 0 : i32
    return %c0_i32, %c0_i32_0, %c0_i32_1 : i32, i32, i32
  }
}

</mosaic_0001>

<llo_original>
// kernel: sdpa_dropout.1
$region0: #{sdpa_dropout.1}
  #allocation0 [shape = 'u32[]', space=smem, size = 0x4, offset = 0x4, fixed_abs, tag = 'smem constant byte address 0x4 - core index']
  #allocation1 [shape = 'u32[144,128]{1,0:T(1,128)}', space=vmem, size = 0x12000, scoped, tag = 'internal scratch']
  %s0 = inlined_call_operand.vmem [shape: f32[8,8,16], index: 0, kind: input, shape index: {}]
  %s1 = inlined_call_operand.hbm [shape: f32[8,8,16], index: 1, kind: input, shape index: {}]
  %s2 = inlined_call_operand.hbm [shape: f32[8,8,16], index: 2, kind: input, shape index: {}]
  %s3 = inlined_call_operand.vmem [shape: f32[8,8,8], index: 3, kind: input, shape index: {}]
  %s4 = inlined_call_operand.hbm [shape: f32[8,8,16], index: 4, kind: output, shape index: {}]
  %s5 = sld [smem:[#allocation0]]
  $region34: #{sdpa_dropout.1} parent=0
    _
  %s7 = ssub.s32 1, %s5
  %s8 = scalar_select 0, %s7, %s5
  $region1: #{sdpa_dropout.1} parent=0
    #allocation2 [shape = 'u8[32768]{0}', space=vmem, size = 0x8000, scoped, tag = 'input window, operand 1, single buffered']
    #allocation3 [shape = 's32[1]{0}', space=sflag, size = 0x4, scoped, tag = 'scoped memory for sdpa_dropout.1']
    #allocation4 [shape = 's32[1]{0}', space=sflag, size = 0x4, scoped, tag = 'scoped memory for sdpa_dropout.1']
    #allocation5 [shape = 'u8[32768]{0}', space=vmem, size = 0x8000, scoped, tag = 'input window, operand 2, single buffered']
    #allocation6 [shape = 's32[1]{0}', space=sflag, size = 0x4, scoped, tag = 'scoped memory for sdpa_dropout.1']
    #allocation7 [shape = 'u8[32768]{0}', space=vmem, size = 0x8000, scoped, tag = 'output window, operand 0, single buffered']
    %9 = vsyncpa [#allocation3], 0
    %10 = vsyncpa [#allocation6], 0
    %11 = vsyncpa [#allocation4], 0
    // Predicated region
    $region2: #{sdpa_dropout.1} parent=1 // pred_check
      _
    $region3: #{sdpa_dropout.1} parent=1 // pred_check_branch
      %13 = sbr.rel (0) target = $region5
    $region4: #{sdpa_dropout.1} parent=1 // pred_region
      _
    $region5: #{sdpa_dropout.1} parent=1 // pred_fallthru
      _
    // Predicated region
    $region6: #{sdpa_dropout.1} parent=1 // pred_check
      _
    $region7: #{sdpa_dropout.1} parent=1 // pred_check_branch
      %15 = sbr.rel (0) target = $region9
    $region8: #{sdpa_dropout.1} parent=1 // pred_region
      %s17 = ssub.s32 1024, 1024
      %18 = vsyncadd [#allocation3], %s17
      %s19 = sshll.u32 [#allocation2], 4
      %s20 = int_to_ptr.vmem [resolvable:$true] %s19
      %25 = dma.hbm_to_vmem [thread:$0]  %s1, 1024, %s20, [#allocation3], 128, 128, 8
    $region9: #{sdpa_dropout.1} parent=1 // pred_fallthru
      _
    // Predicated region
    $region10: #{sdpa_dropout.1} parent=1 // pred_check
      _
    $region11: #{sdpa_dropout.1} parent=1 // pred_check_branch
      %27 = sbr.rel (0) target = $region13
    $region12: #{sdpa_dropout.1} parent=1 // pred_region
      %s29 = ssub.s32 1024, 1024
      %30 = vsyncadd [#allocation6], %s29
      %s31 = sshll.u32 [#allocation5], 4
      %s32 = int_to_ptr.vmem [resolvable:$true] %s31
      %37 = dma.hbm_to_vmem [thread:$0]  %s2, 1024, %s32, [#allocation6], 128, 128, 8
    $region13: #{sdpa_dropout.1} parent=1 // pred_fallthru
      _
    // Predicated region
    $region14: #{sdpa_dropout.1} parent=1 // pred_check
      _
    $region15: #{sdpa_dropout.1} parent=1 // pred_check_branch
      %39 = sbr.rel (0) target = $region17
    $region16: #{sdpa_dropout.1} parent=1 // pred_region
      _
    $region17: #{sdpa_dropout.1} parent=1 // pred_fallthru
      _
    // Predicated region
    $region18: #{sdpa_dropout.1} parent=1 // pred_check
      _
    $region19: #{sdpa_dropout.1} parent=1 // pred_check_branch
      %41 = sbr.rel (0) target = $region21
    $region20: #{sdpa_dropout.1} parent=1 // pred_region
      %42 = dma.done [#allocation3], 1024
    $region21: #{sdpa_dropout.1} parent=1 // pred_fallthru
      _
    // Predicated region
    $region22: #{sdpa_dropout.1} parent=1 // pred_check
      _
    $region23: #{sdpa_dropout.1} parent=1 // pred_check_branch
      %44 = sbr.rel (0) target = $region25
    $region24: #{sdpa_dropout.1} parent=1 // pred_region
      %45 = dma.done [#allocation6], 1024
    $region25: #{sdpa_dropout.1} parent=1 // pred_fallthru
      _
    %v46 = vld [vmem:[%s0] sm:$0xff]
    %v47 = vld [vmem:[%s0 + $0x8] sm:$0xff]
    %v48 = vld [vmem:[%s0 + $0x10] sm:$0xff]
    %v49 = vld [vmem:[%s0 + $0x18] sm:$0xff]
    %v50 = vld [vmem:[%s0 + $0x20] sm:$0xff]
    %v51 = vld [vmem:[%s0 + $0x28] sm:$0xff]
    %v52 = vld [vmem:[%s0 + $0x30] sm:$0xff]
    %v53 = vld [vmem:[%s0 + $0x38] sm:$0xff]
    %v54 = vld [vmem:[#allocation2] sm:$0xff]
    %v55 = vld [vmem:[#allocation2 + $0x8] sm:$0xff]
    %v56 = vld [vmem:[#allocation2 + $0x10] sm:$0xff]
    %v57 = vld [vmem:[#allocation2 + $0x18] sm:$0xff]
    %v58 = vld [vmem:[#allocation2 + $0x20] sm:$0xff]
    %v59 = vld [vmem:[#allocation2 + $0x28] sm:$0xff]
    %v60 = vld [vmem:[#allocation2 + $0x30] sm:$0xff]
    %v61 = vld [vmem:[#allocation2 + $0x38] sm:$0xff]
    %v62 = vld [vmem:[#allocation5] sm:$0xff]
    %v63 = vld [vmem:[#allocation5 + $0x8] sm:$0xff]
    %v64 = vld [vmem:[#allocation5 + $0x10] sm:$0xff]
    %v65 = vld [vmem:[#allocation5 + $0x18] sm:$0xff]
    %v66 = vld [vmem:[#allocation5 + $0x20] sm:$0xff]
    %v67 = vld [vmem:[#allocation5 + $0x28] sm:$0xff]
    %v68 = vld [vmem:[#allocation5 + $0x30] sm:$0xff]
    %v69 = vld [vmem:[#allocation5 + $0x38] sm:$0xff]
    %v70 = vld [vmem:[%s3] sm:$0xff]
    %v71 = vld [vmem:[%s3 + $0x8] sm:$0xff]
    %v72 = vld [vmem:[%s3 + $0x10] sm:$0xff]
    %v73 = vld [vmem:[%s3 + $0x18] sm:$0xff]
    %v74 = vld [vmem:[%s3 + $0x20] sm:$0xff]
    %v75 = vld [vmem:[%s3 + $0x28] sm:$0xff]
    %v76 = vld [vmem:[%s3 + $0x30] sm:$0xff]
    %v77 = vld [vmem:[%s3 + $0x38] sm:$0xff]
    %vm78 = vcmask 130048
    %v80 = vsel %vm78, %v46, 0
    %v83 = vsel %vm78, %v54, 0
    %85 = vmatprep.subr.mxu0 0.0
    %86 = vmatpush1.xpose.msra.mxu0 0.0
    %87 = vmatprep.subr.mxu0 0.0
    %88 = vmatpush1.xpose.msra.mxu0 0.0
    %89 = vmatprep.subr.mxu0 0.0
    %90 = vmatpush1.xpose.msra.mxu0 0.0
    %91 = vmatprep.subr.mxu0 0.0
    %92 = vmatpush1.xpose.msra.mxu0 0.0
    %93 = vmatprep.subr.mxu0 0.0
    %94 = vmatpush1.xpose.msra.mxu0 0.0
    %95 = vmatprep.subr.mxu0 0.0
    %96 = vmatpush1.xpose.msra.mxu0 0.0
    %97 = vmatprep.subr.mxu0 0.0
    %98 = vmatpush1.xpose.msra.mxu0 0.0
    %99 = vmatprep.subr.mxu0 0.0
    %100 = vmatpush1.xpose.msra.mxu0 0.0
    %101 = vmatprep.subr.mxu0 0.0
    %102 = vmatpush1.xpose.msra.mxu0 0.0
    %103 = vmatprep.subr.mxu0 0.0
    %104 = vmatpush1.xpose.msra.mxu0 0.0
    %105 = vmatprep.subr.mxu0 0.0
    %106 = vmatpush1.xpose.msra.mxu0 0.0
    %107 = vmatprep.subr.mxu0 0.0
    %108 = vmatpush1.xpose.msra.mxu0 0.0
    %109 = vmatprep.subr.mxu0 0.0
    %110 = vmatpush1.xpose.msra.mxu0 0.0
    %111 = vmatprep.subr.mxu0 0.0
    %112 = vmatpush1.xpose.msra.mxu0 0.0
    %113 = vmatprep.subr.mxu0 0.0
    %114 = vmatpush1.xpose.msra.mxu0 0.0
    %115 = vmatprep.subr.mxu0 0.0
    %116 = vmatpush1.xpose.msra.mxu0 %v83
    %117 = vmatprep.subr.mxu0 0.0
    %118 = vmatpush2.xpose.msra.mxu0 0.0
    %119 = vmatprep.subr.mxu0 0.0
    %120 = vmatpush2.xpose.msra.mxu0 0.0
    %121 = vmatprep.subr.mxu0 0.0
    %122 = vmatpush2.xpose.msra.mxu0 0.0
    %123 = vmatprep.subr.mxu0 0.0
    %124 = vmatpush2.xpose.msra.mxu0 0.0
    %125 = vmatprep.subr.mxu0 0.0
    %126 = vmatpush2.xpose.msra.mxu0 0.0
    %127 = vmatprep.subr.mxu0 0.0
    %128 = vmatpush2.xpose.msra.mxu0 0.0
    %129 = vmatprep.subr.mxu0 0.0
    %130 = vmatpush2.xpose.msra.mxu0 0.0
    %131 = vmatprep.subr.mxu0 0.0
    %132 = vmatpush2.xpose.msra.mxu0 0.0
    %133 = vmatprep.subr.mxu0 0.0
    %134 = vmatpush2.xpose.msra.mxu0 0.0
    %135 = vmatprep.subr.mxu0 0.0
    %136 = vmatpush2.xpose.msra.mxu0 0.0
    %137 = vmatprep.subr.mxu0 0.0
    %138 = vmatpush2.xpose.msra.mxu0 0.0
    %139 = vmatprep.subr.mxu0 0.0
    %140 = vmatpush2.xpose.msra.mxu0 0.0
    %141 = vmatprep.subr.mxu0 0.0
    %142 = vmatpush2.xpose.msra.mxu0 0.0
    %143 = vmatprep.subr.mxu0 0.0
    %144 = vmatpush2.xpose.msra.mxu0 0.0
    %145 = vmatprep.subr.mxu0 0.0
    %146 = vmatpush2.xpose.msra.mxu0 0.0
    %147 = vmatprep.subr.mxu0 0.0
    %148 = vmatpush2.xpose.msra.mxu0 0.0
    %149 = vmatprep.mubr.f32.mxu0 0.0
    %150 = vmatmul.mubr.f32.gmra.mxu0 %v80
    %v151 = vpop.f32.mrf.mxu0
    %v152 = vadd.f32 0.0, %v151
    %v153 = vpop.f32.mrf.mxu0
    %154 = vdwg.mxu0
    %v156 = vsel %vm78, %v47, 0
    %v159 = vsel %vm78, %v55, 0
    %161 = vmatprep.subr.mxu0 0.0
    %162 = vmatpush1.xpose.msra.mxu0 0.0
    %163 = vmatprep.subr.mxu0 0.0
    %164 = vmatpush1.xpose.msra.mxu0 0.0
    %165 = vmatprep.subr.mxu0 0.0
    %166 = vmatpush1.xpose.msra.mxu0 0.0
    %167 = vmatprep.subr.mxu0 0.0
    %168 = vmatpush1.xpose.msra.mxu0 0.0
    %169 = vmatprep.subr.mxu0 0.0
    %170 = vmatpush1.xpose.msra.mxu0 0.0
    %171 = vmatprep.subr.mxu0 0.0
    %172 = vmatpush1.xpose.msra.mxu0 0.0
    %173 = vmatprep.subr.mxu0 0.0
    %174 = vmatpush1.xpose.msra.mxu0 0.0
    %175 = vmatprep.subr.mxu0 0.0
    %176 = vmatpush1.xpose.msra.mxu0 0.0
    %177 = vmatprep.subr.mxu0 0.0
    %178 = vmatpush1.xpose.msra.mxu0 0.0
    %179 = vmatprep.subr.mxu0 0.0
    %180 = vmatpush1.xpose.msra.mxu0 0.0
    %181 = vmatprep.subr.mxu0 0.0
    %182 = vmatpush1.xpose.msra.mxu0 0.0
    %183 = vmatprep.subr.mxu0 0.0
    %184 = vmatpush1.xpose.msra.mxu0 0.0
    %185 = vmatprep.subr.mxu0 0.0
    %186 = vmatpush1.xpose.msra.mxu0 0.0
    %187 = vmatprep.subr.mxu0 0.0
    %188 = vmatpush1.xpose.msra.mxu0 0.0
    %189 = vmatprep.subr.mxu0 0.0
    %190 = vmatpush1.xpose.msra.mxu0 0.0
    %191 = vmatprep.subr.mxu0 0.0
    %192 = vmatpush1.xpose.msra.mxu0 %v159
    %193 = vmatprep.subr.mxu0 0.0
    %194 = vmatpush2.xpose.msra.mxu0 0.0
    %195 = vmatprep.subr.mxu0 0.0
    %196 = vmatpush2.xpose.msra.mxu0 0.0
    %197 = vmatprep.subr.mxu0 0.0
    %198 = vmatpush2.xpose.msra.mxu0 0.0
    %199 = vmatprep.subr.mxu0 0.0
    %200 = vmatpush2.xpose.msra.mxu0 0.0
    %201 = vmatprep.subr.mxu0 0.0
    %202 = vmatpush2.xpose.msra.mxu0 0.0
    %203 = vmatprep.subr.mxu0 0.0
    %204 = vmatpush2.xpose.msra.mxu0 0.0
    %205 = vmatprep.subr.mxu0 0.0
    %206 = vmatpush2.xpose.msra.mxu0 0.0
    %207 = vmatprep.subr.mxu0 0.0
    %208 = vmatpush2.xpose.msra.mxu0 0.0
    %209 = vmatprep.subr.mxu0 0.0
    %210 = vmatpush2.xpose.msra.mxu0 0.0
    %211 = vmatprep.subr.mxu0 0.0
    %212 = vmatpush2.xpose.msra.mxu0 0.0
    %213 = vmatprep.subr.mxu0 0.0
    %214 = vmatpush2.xpose.msra.mxu0 0.0
    %215 = vmatprep.subr.mxu0 0.0
    %216 = vmatpush2.xpose.msra.mxu0 0.0
    %217 = vmatprep.subr.mxu0 0.0
    %218 = vmatpush2.xpose.msra.mxu0 0.0
    %219 = vmatprep.subr.mxu0 0.0
    %220 = vmatpush2.xpose.msra.mxu0 0.0
    %221 = vmatprep.subr.mxu0 0.0
    %222 = vmatpush2.xpose.msra.mxu0 0.0
    %223 = vmatprep.subr.mxu0 0.0
    %224 = vmatpush2.xpose.msra.mxu0 0.0
    %225 = vmatprep.mubr.f32.mxu0 0.0
    %226 = vmatmul.mubr.f32.gmra.mxu0 %v156
    %v227 = vpop.f32.mrf.mxu0
    %v228 = vadd.f32 0.0, %v227
    %v229 = vpop.f32.mrf.mxu0
    %230 = vdwg.mxu0
    %v232 = vsel %vm78, %v48, 0
    %v235 = vsel %vm78, %v56, 0
    %237 = vmatprep.subr.mxu0 0.0
    %238 = vmatpush1.xpose.msra.mxu0 0.0
    %239 = vmatprep.subr.mxu0 0.0
    %240 = vmatpush1.xpose.msra.mxu0 0.0
    %241 = vmatprep.subr.mxu0 0.0
    %242 = vmatpush1.xpose.msra.mxu0 0.0
    %243 = vmatprep.subr.mxu0 0.0
    %244 = vmatpush1.xpose.msra.mxu0 0.0
    %245 = vmatprep.subr.mxu0 0.0
    %246 = vmatpush1.xpose.msra.mxu0 0.0
    %247 = vmatprep.subr.mxu0 0.0
    %248 = vmatpush1.xpose.msra.mxu0 0.0
    %249 = vmatprep.subr.mxu0 0.0
    %250 = vmatpush1.xpose.msra.mxu0 0.0
    %251 = vmatprep.subr.mxu0 0.0
    %252 = vmatpush1.xpose.msra.mxu0 0.0
    %253 = vmatprep.subr.mxu0 0.0
    %254 = vmatpush1.xpose.msra.mxu0 0.0
    %255 = vmatprep.subr.mxu0 0.0
    %256 = vmatpush1.xpose.msra.mxu0 0.0
    %257 = vmatprep.subr.mxu0 0.0
    %258 = vmatpush1.xpose.msra.mxu0 0.0
    %259 = vmatprep.subr.mxu0 0.0
    %260 = vmatpush1.xpose.msra.mxu0 0.0
    %261 = vmatprep.subr.mxu0 0.0
    %262 = vmatpush1.xpose.msra.mxu0 0.0
    %263 = vmatprep.subr.mxu0 0.0
    %264 = vmatpush1.xpose.msra.mxu0 0.0
    %265 = vmatprep.subr.mxu0 0.0
    %266 = vmatpush1.xpose.msra.mxu0 0.0
    %267 = vmatprep.subr.mxu0 0.0
    %268 = vmatpush1.xpose.msra.mxu0 %v235
    %269 = vmatprep.subr.mxu0 0.0
    %270 = vmatpush2.xpose.msra.mxu0 0.0
    %271 = vmatprep.subr.mxu0 0.0
    %272 = vmatpush2.xpose.msra.mxu0 0.0
    %273 = vmatprep.subr.mxu0 0.0
    %274 = vmatpush2.xpose.msra.mxu0 0.0
    %275 = vmatprep.subr.mxu0 0.0
    %276 = vmatpush2.xpose.msra.mxu0 0.0
    %277 = vmatprep.subr.mxu0 0.0
    %278 = vmatpush2.xpose.msra.mxu0 0.0
    %279 = vmatprep.subr.mxu0 0.0
    %280 = vmatpush2.xpose.msra.mxu0 0.0
    %281 = vmatprep.subr.mxu0 0.0
    %282 = vmatpush2.xpose.msra.mxu0 0.0
    %283 = vmatprep.subr.mxu0 0.0
    %284 = vmatpush2.xpose.msra.mxu0 0.0
    %285 = vmatprep.subr.mxu0 0.0
    %286 = vmatpush2.xpose.msra.mxu0 0.0
    %287 = vmatprep.subr.mxu0 0.0
    %288 = vmatpush2.xpose.msra.mxu0 0.0
    %289 = vmatprep.subr.mxu0 0.0
    %290 = vmatpush2.xpose.msra.mxu0 0.0
    %291 = vmatprep.subr.mxu0 0.0
    %292 = vmatpush2.xpose.msra.mxu0 0.0
    %293 = vmatprep.subr.mxu0 0.0
    %294 = vmatpush2.xpose.msra.mxu0 0.0
    %295 = vmatprep.subr.mxu0 0.0
    %296 = vmatpush2.xpose.msra.mxu0 0.0
    %297 = vmatprep.subr.mxu0 0.0
    %298 = vmatpush2.xpose.msra.mxu0 0.0
    %299 = vmatprep.subr.mxu0 0.0
    %300 = vmatpush2.xpose.msra.mxu0 0.0
    %301 = vmatprep.mubr.f32.mxu0 0.0
    %302 = vmatmul.mubr.f32.gmra.mxu0 %v232
    %v303 = vpop.f32.mrf.mxu0
    %v304 = vadd.f32 0.0, %v303
    %v305 = vpop.f32.mrf.mxu0
    %306 = vdwg.mxu0
    %v308 = vsel %vm78, %v49, 0
    %v311 = vsel %vm78, %v57, 0
    %313 = vmatprep.subr.mxu0 0.0
    %314 = vmatpush1.xpose.msra.mxu0 0.0
    %315 = vmatprep.subr.mxu0 0.0
    %316 = vmatpush1.xpose.msra.mxu0 0.0
    %317 = vmatprep.subr.mxu0 0.0
    %318 = vmatpush1.xpose.msra.mxu0 0.0
    %319 = vmatprep.subr.mxu0 0.0
    %320 = vmatpush1.xpose.msra.mxu0 0.0
    %321 = vmatprep.subr.mxu0 0.0
    %322 = vmatpush1.xpose.msra.mxu0 0.0
    %323 = vmatprep.subr.mxu0 0.0
    %324 = vmatpush1.xpose.msra.mxu0 0.0
    %325 = vmatprep.subr.mxu0 0.0
    %326 = vmatpush1.xpose.msra.mxu0 0.0
    %327 = vmatprep.subr.mxu0 0.0
    %328 = vmatpush1.xpose.msra.mxu0 0.0
    %329 = vmatprep.subr.mxu0 0.0
    %330 = vmatpush1.xpose.msra.mxu0 0.0
    %331 = vmatprep.subr.mxu0 0.0
    %332 = vmatpush1.xpose.msra.mxu0 0.0
    %333 = vmatprep.subr.mxu0 0.0
    %334 = vmatpush1.xpose.msra.mxu0 0.0
    %335 = vmatprep.subr.mxu0 0.0
    %336 = vmatpush1.xpose.msra.mxu0 0.0
    %337 = vmatprep.subr.mxu0 0.0
    %338 = vmatpush1.xpose.msra.mxu0 0.0
    %339 = vmatprep.subr.mxu0 0.0
    %340 = vmatpush1.xpose.msra.mxu0 0.0
    %341 = vmatprep.subr.mxu0 0.0
    %342 = vmatpush1.xpose.msra.mxu0 0.0
    %343 = vmatprep.subr.mxu0 0.0
    %344 = vmatpush1.xpose.msra.mxu0 %v311
    %345 = vmatprep.subr.mxu0 0.0
    %346 = vmatpush2.xpose.msra.mxu0 0.0
    %347 = vmatprep.subr.mxu0 0.0
    %348 = vmatpush2.xpose.msra.mxu0 0.0
    %349 = vmatprep.subr.mxu0 0.0
    %350 = vmatpush2.xpose.msra.mxu0 0.0
    %351 = vmatprep.subr.mxu0 0.0
    %352 = vmatpush2.xpose.msra.mxu0 0.0
    %353 = vmatprep.subr.mxu0 0.0
    %354 = vmatpush2.xpose.msra.mxu0 0.0
    %355 = vmatprep.subr.mxu0 0.0
    %356 = vmatpush2.xpose.msra.mxu0 0.0
    %357 = vmatprep.subr.mxu0 0.0
    %358 = vmatpush2.xpose.msra.mxu0 0.0
    %359 = vmatprep.subr.mxu0 0.0
    %360 = vmatpush2.xpose.msra.mxu0 0.0
    %361 = vmatprep.subr.mxu0 0.0
    %362 = vmatpush2.xpose.msra.mxu0 0.0
    %363 = vmatprep.subr.mxu0 0.0
    %364 = vmatpush2.xpose.msra.mxu0 0.0
    %365 = vmatprep.subr.mxu0 0.0
    %366 = vmatpush2.xpose.msra.mxu0 0.0
    %367 = vmatprep.subr.mxu0 0.0
    %368 = vmatpush2.xpose.msra.mxu0 0.0
    %369 = vmatprep.subr.mxu0 0.0
    %370 = vmatpush2.xpose.msra.mxu0 0.0
    %371 = vmatprep.subr.mxu0 0.0
    %372 = vmatpush2.xpose.msra.mxu0 0.0
    %373 = vmatprep.subr.mxu0 0.0
    %374 = vmatpush2.xpose.msra.mxu0 0.0
    %375 = vmatprep.subr.mxu0 0.0
    %376 = vmatpush2.xpose.msra.mxu0 0.0
    %377 = vmatprep.mubr.f32.mxu0 0.0
    %378 = vmatmul.mubr.f32.gmra.mxu0 %v308
    %v379 = vpop.f32.mrf.mxu0
    %v380 = vadd.f32 0.0, %v379
    %v381 = vpop.f32.mrf.mxu0
    %382 = vdwg.mxu0
    %v384 = vsel %vm78, %v50, 0
    %v387 = vsel %vm78, %v58, 0
    %389 = vmatprep.subr.mxu0 0.0
    %390 = vmatpush1.xpose.msra.mxu0 0.0
    %391 = vmatprep.subr.mxu0 0.0
    %392 = vmatpush1.xpose.msra.mxu0 0.0
    %393 = vmatprep.subr.mxu0 0.0
    %394 = vmatpush1.xpose.msra.mxu0 0.0
    %395 = vmatprep.subr.mxu0 0.0
    %396 = vmatpush1.xpose.msra.mxu0 0.0
    %397 = vmatprep.subr.mxu0 0.0
    %398 = vmatpush1.xpose.msra.mxu0 0.0
    %399 = vmatprep.subr.mxu0 0.0
    %400 = vmatpush1.xpose.msra.mxu0 0.0
    %401 = vmatprep.subr.mxu0 0.0
    %402 = vmatpush1.xpose.msra.mxu0 0.0
    %403 = vmatprep.subr.mxu0 0.0
    %404 = vmatpush1.xpose.msra.mxu0 0.0
    %405 = vmatprep.subr.mxu0 0.0
    %406 = vmatpush1.xpose.msra.mxu0 0.0
    %407 = vmatprep.subr.mxu0 0.0
    %408 = vmatpush1.xpose.msra.mxu0 0.0
    %409 = vmatprep.subr.mxu0 0.0
    %410 = vmatpush1.xpose.msra.mxu0 0.0
    %411 = vmatprep.subr.mxu0 0.0
    %412 = vmatpush1.xpose.msra.mxu0 0.0
    %413 = vmatprep.subr.mxu0 0.0
    %414 = vmatpush1.xpose.msra.mxu0 0.0
    %415 = vmatprep.subr.mxu0 0.0
    %416 = vmatpush1.xpose.msra.mxu0 0.0
    %417 = vmatprep.subr.mxu0 0.0
    %418 = vmatpush1.xpose.msra.mxu0 0.0
    %419 = vmatprep.subr.mxu0 0.0
    %420 = vmatpush1.xpose.msra.mxu0 %v387
    %421 = vmatprep.subr.mxu0 0.0
    %422 = vmatpush2.xpose.msra.mxu0 0.0
    %423 = vmatprep.subr.mxu0 0.0
    %424 = vmatpush2.xpose.msra.mxu0 0.0
    %425 = vmatprep.subr.mxu0 0.0
    %426 = vmatpush2.xpose.msra.mxu0 0.0
    %427 = vmatprep.subr.mxu0 0.0
    %428 = vmatpush2.xpose.msra.mxu0 0.0
    %429 = vmatprep.subr.mxu0 0.0
    %430 = vmatpush2.xpose.msra.mxu0 0.0
    %431 = vmatprep.subr.mxu0 0.0
    %432 = vmatpush2.xpose.msra.mxu0 0.0
    %433 = vmatprep.subr.mxu0 0.0
    %434 = vmatpush2.xpose.msra.mxu0 0.0
    %435 = vmatprep.subr.mxu0 0.0
    %436 = vmatpush2.xpose.msra.mxu0 0.0
    %437 = vmatprep.subr.mxu0 0.0
    %438 = vmatpush2.xpose.msra.mxu0 0.0
    %439 = vmatprep.subr.mxu0 0.0
    %440 = vmatpush2.xpose.msra.mxu0 0.0
    %441 = vmatprep.subr.mxu0 0.0
    %442 = vmatpush2.xpose.msra.mxu0 0.0
    %443 = vmatprep.subr.mxu0 0.0
    %444 = vmatpush2.xpose.msra.mxu0 0.0
    %445 = vmatprep.subr.mxu0 0.0
    %446 = vmatpush2.xpose.msra.mxu0 0.0
    %447 = vmatprep.subr.mxu0 0.0
    %448 = vmatpush2.xpose.msra.mxu0 0.0
    %449 = vmatprep.subr.mxu0 0.0
    %450 = vmatpush2.xpose.msra.mxu0 0.0
    %451 = vmatprep.subr.mxu0 0.0
    %452 = vmatpush2.xpose.msra.mxu0 0.0
    %453 = vmatprep.mubr.f32.mxu0 0.0
    %454 = vmatmul.mubr.f32.gmra.mxu0 %v384
    %v455 = vpop.f32.mrf.mxu0
    %v456 = vadd.f32 0.0, %v455
    %v457 = vpop.f32.mrf.mxu0
    %458 = vdwg.mxu0
    %v460 = vsel %vm78, %v51, 0
    %v463 = vsel %vm78, %v59, 0
    %465 = vmatprep.subr.mxu0 0.0
    %466 = vmatpush1.xpose.msra.mxu0 0.0
    %467 = vmatprep.subr.mxu0 0.0
    %468 = vmatpush1.xpose.msra.mxu0 0.0
    %469 = vmatprep.subr.mxu0 0.0
    %470 = vmatpush1.xpose.msra.mxu0 0.0
    %471 = vmatprep.subr.mxu0 0.0
    %472 = vmatpush1.xpose.msra.mxu0 0.0
    %473 = vmatprep.subr.mxu0 0.0
    %474 = vmatpush1.xpose.msra.mxu0 0.0
    %475 = vmatprep.subr.mxu0 0.0
    %476 = vmatpush1.xpose.msra.mxu0 0.0
    %477 = vmatprep.subr.mxu0 0.0
    %478 = vmatpush1.xpose.msra.mxu0 0.0
    %479 = vmatprep.subr.mxu0 0.0
    %480 = vmatpush1.xpose.msra.mxu0 0.0
    %481 = vmatprep.subr.mxu0 0.0
    %482 = vmatpush1.xpose.msra.mxu0 0.0
    %483 = vmatprep.subr.mxu0 0.0
    %484 = vmatpush1.xpose.msra.mxu0 0.0
    %485 = vmatprep.subr.mxu0 0.0
    %486 = vmatpush1.xpose.msra.mxu0 0.0
    %487 = vmatprep.subr.mxu0 0.0
    %488 = vmatpush1.xpose.msra.mxu0 0.0
    %489 = vmatprep.subr.mxu0 0.0
    %490 = vmatpush1.xpose.msra.mxu0 0.0
    %491 = vmatprep.subr.mxu0 0.0
    %492 = vmatpush1.xpose.msra.mxu0 0.0
    %493 = vmatprep.subr.mxu0 0.0
    %494 = vmatpush1.xpose.msra.mxu0 0.0
    %495 = vmatprep.subr.mxu0 0.0
    %496 = vmatpush1.xpose.msra.mxu0 %v463
    %497 = vmatprep.subr.mxu0 0.0
    %498 = vmatpush2.xpose.msra.mxu0 0.0
    %499 = vmatprep.subr.mxu0 0.0
    %500 = vmatpush2.xpose.msra.mxu0 0.0
    %501 = vmatprep.subr.mxu0 0.0
    %502 = vmatpush2.xpose.msra.mxu0 0.0
    %503 = vmatprep.subr.mxu0 0.0
    %504 = vmatpush2.xpose.msra.mxu0 0.0
    %505 = vmatprep.subr.mxu0 0.0
    %506 = vmatpush2.xpose.msra.mxu0 0.0
    %507 = vmatprep.subr.mxu0 0.0
    %508 = vmatpush2.xpose.msra.mxu0 0.0
    %509 = vmatprep.subr.mxu0 0.0
    %510 = vmatpush2.xpose.msra.mxu0 0.0
    %511 = vmatprep.subr.mxu0 0.0
    %512 = vmatpush2.xpose.msra.mxu0 0.0
    %513 = vmatprep.subr.mxu0 0.0
    %514 = vmatpush2.xpose.msra.mxu0 0.0
    %515 = vmatprep.subr.mxu0 0.0
    %516 = vmatpush2.xpose.msra.mxu0 0.0
    %517 = vmatprep.subr.mxu0 0.0
    %518 = vmatpush2.xpose.msra.mxu0 0.0
    %519 = vmatprep.subr.mxu0 0.0
    %520 = vmatpush2.xpose.msra.mxu0 0.0
    %521 = vmatprep.subr.mxu0 0.0
    %522 = vmatpush2.xpose.msra.mxu0 0.0
    %523 = vmatprep.subr.mxu0 0.0
    %524 = vmatpush2.xpose.msra.mxu0 0.0
    %525 = vmatprep.subr.mxu0 0.0
    %526 = vmatpush2.xpose.msra.mxu0 0.0
    %527 = vmatprep.subr.mxu0 0.0
    %528 = vmatpush2.xpose.msra.mxu0 0.0
    %529 = vmatprep.mubr.f32.mxu0 0.0
    %530 = vmatmul.mubr.f32.gmra.mxu0 %v460
    %v531 = vpop.f32.mrf.mxu0
    %v532 = vadd.f32 0.0, %v531
    %v533 = vpop.f32.mrf.mxu0
    %534 = vdwg.mxu0
    %v536 = vsel %vm78, %v52, 0
    %v539 = vsel %vm78, %v60, 0
    %541 = vmatprep.subr.mxu0 0.0
    %542 = vmatpush1.xpose.msra.mxu0 0.0
    %543 = vmatprep.subr.mxu0 0.0
    %544 = vmatpush1.xpose.msra.mxu0 0.0
    %545 = vmatprep.subr.mxu0 0.0
    %546 = vmatpush1.xpose.msra.mxu0 0.0
    %547 = vmatprep.subr.mxu0 0.0
    %548 = vmatpush1.xpose.msra.mxu0 0.0
    %549 = vmatprep.subr.mxu0 0.0
    %550 = vmatpush1.xpose.msra.mxu0 0.0
    %551 = vmatprep.subr.mxu0 0.0
    %552 = vmatpush1.xpose.msra.mxu0 0.0
    %553 = vmatprep.subr.mxu0 0.0
    %554 = vmatpush1.xpose.msra.mxu0 0.0
    %555 = vmatprep.subr.mxu0 0.0
    %556 = vmatpush1.xpose.msra.mxu0 0.0
    %557 = vmatprep.subr.mxu0 0.0
    %558 = vmatpush1.xpose.msra.mxu0 0.0
    %559 = vmatprep.subr.mxu0 0.0
    %560 = vmatpush1.xpose.msra.mxu0 0.0
    %561 = vmatprep.subr.mxu0 0.0
    %562 = vmatpush1.xpose.msra.mxu0 0.0
    %563 = vmatprep.subr.mxu0 0.0
    %564 = vmatpush1.xpose.msra.mxu0 0.0
    %565 = vmatprep.subr.mxu0 0.0
    %566 = vmatpush1.xpose.msra.mxu0 0.0
    %567 = vmatprep.subr.mxu0 0.0
    %568 = vmatpush1.xpose.msra.mxu0 0.0
    %569 = vmatprep.subr.mxu0 0.0
    %570 = vmatpush1.xpose.msra.mxu0 0.0
    %571 = vmatprep.subr.mxu0 0.0
    %572 = vmatpush1.xpose.msra.mxu0 %v539
    %573 = vmatprep.subr.mxu0 0.0
    %574 = vmatpush2.xpose.msra.mxu0 0.0
    %575 = vmatprep.subr.mxu0 0.0
    %576 = vmatpush2.xpose.msra.mxu0 0.0
    %577 = vmatprep.subr.mxu0 0.0
    %578 = vmatpush2.xpose.msra.mxu0 0.0
    %579 = vmatprep.subr.mxu0 0.0
    %580 = vmatpush2.xpose.msra.mxu0 0.0
    %581 = vmatprep.subr.mxu0 0.0
    %582 = vmatpush2.xpose.msra.mxu0 0.0
    %583 = vmatprep.subr.mxu0 0.0
    %584 = vmatpush2.xpose.msra.mxu0 0.0
    %585 = vmatprep.subr.mxu0 0.0
    %586 = vmatpush2.xpose.msra.mxu0 0.0
    %587 = vmatprep.subr.mxu0 0.0
    %588 = vmatpush2.xpose.msra.mxu0 0.0
    %589 = vmatprep.subr.mxu0 0.0
    %590 = vmatpush2.xpose.msra.mxu0 0.0
    %591 = vmatprep.subr.mxu0 0.0
    %592 = vmatpush2.xpose.msra.mxu0 0.0
    %593 = vmatprep.subr.mxu0 0.0
    %594 = vmatpush2.xpose.msra.mxu0 0.0
    %595 = vmatprep.subr.mxu0 0.0
    %596 = vmatpush2.xpose.msra.mxu0 0.0
    %597 = vmatprep.subr.mxu0 0.0
    %598 = vmatpush2.xpose.msra.mxu0 0.0
    %599 = vmatprep.subr.mxu0 0.0
    %600 = vmatpush2.xpose.msra.mxu0 0.0
    %601 = vmatprep.subr.mxu0 0.0
    %602 = vmatpush2.xpose.msra.mxu0 0.0
    %603 = vmatprep.subr.mxu0 0.0
    %604 = vmatpush2.xpose.msra.mxu0 0.0
    %605 = vmatprep.mubr.f32.mxu0 0.0
    %606 = vmatmul.mubr.f32.gmra.mxu0 %v536
    %v607 = vpop.f32.mrf.mxu0
    %v608 = vadd.f32 0.0, %v607
    %v609 = vpop.f32.mrf.mxu0
    %610 = vdwg.mxu0
    %v612 = vsel %vm78, %v53, 0
    %v615 = vsel %vm78, %v61, 0
    %617 = vmatprep.subr.mxu0 0.0
    %618 = vmatpush1.xpose.msra.mxu0 0.0
    %619 = vmatprep.subr.mxu0 0.0
    %620 = vmatpush1.xpose.msra.mxu0 0.0
    %621 = vmatprep.subr.mxu0 0.0
    %622 = vmatpush1.xpose.msra.mxu0 0.0
    %623 = vmatprep.subr.mxu0 0.0
    %624 = vmatpush1.xpose.msra.mxu0 0.0
    %625 = vmatprep.subr.mxu0 0.0
    %626 = vmatpush1.xpose.msra.mxu0 0.0
    %627 = vmatprep.subr.mxu0 0.0
    %628 = vmatpush1.xpose.msra.mxu0 0.0
    %629 = vmatprep.subr.mxu0 0.0
    %630 = vmatpush1.xpose.msra.mxu0 0.0
    %631 = vmatprep.subr.mxu0 0.0
    %632 = vmatpush1.xpose.msra.mxu0 0.0
    %633 = vmatprep.subr.mxu0 0.0
    %634 = vmatpush1.xpose.msra.mxu0 0.0
    %635 = vmatprep.subr.mxu0 0.0
    %636 = vmatpush1.xpose.msra.mxu0 0.0
    %637 = vmatprep.subr.mxu0 0.0
    %638 = vmatpush1.xpose.msra.mxu0 0.0
    %639 = vmatprep.subr.mxu0 0.0
    %640 = vmatpush1.xpose.msra.mxu0 0.0
    %641 = vmatprep.subr.mxu0 0.0
    %642 = vmatpush1.xpose.msra.mxu0 0.0
    %643 = vmatprep.subr.mxu0 0.0
    %644 = vmatpush1.xpose.msra.mxu0 0.0
    %645 = vmatprep.subr.mxu0 0.0
    %646 = vmatpush1.xpose.msra.mxu0 0.0
    %647 = vmatprep.subr.mxu0 0.0
    %648 = vmatpush1.xpose.msra.mxu0 %v615
    %649 = vmatprep.subr.mxu0 0.0
    %650 = vmatpush2.xpose.msra.mxu0 0.0
    %651 = vmatprep.subr.mxu0 0.0
    %652 = vmatpush2.xpose.msra.mxu0 0.0
    %653 = vmatprep.subr.mxu0 0.0
    %654 = vmatpush2.xpose.msra.mxu0 0.0
    %655 = vmatprep.subr.mxu0 0.0
    %656 = vmatpush2.xpose.msra.mxu0 0.0
    %657 = vmatprep.subr.mxu0 0.0
    %658 = vmatpush2.xpose.msra.mxu0 0.0
    %659 = vmatprep.subr.mxu0 0.0
    %660 = vmatpush2.xpose.msra.mxu0 0.0
    %661 = vmatprep.subr.mxu0 0.0
    %662 = vmatpush2.xpose.msra.mxu0 0.0
    %663 = vmatprep.subr.mxu0 0.0
    %664 = vmatpush2.xpose.msra.mxu0 0.0
    %665 = vmatprep.subr.mxu0 0.0
    %666 = vmatpush2.xpose.msra.mxu0 0.0
    %667 = vmatprep.subr.mxu0 0.0
    %668 = vmatpush2.xpose.msra.mxu0 0.0
    %669 = vmatprep.subr.mxu0 0.0
    %670 = vmatpush2.xpose.msra.mxu0 0.0
    %671 = vmatprep.subr.mxu0 0.0
    %672 = vmatpush2.xpose.msra.mxu0 0.0
    %673 = vmatprep.subr.mxu0 0.0
    %674 = vmatpush2.xpose.msra.mxu0 0.0
    %675 = vmatprep.subr.mxu0 0.0
    %676 = vmatpush2.xpose.msra.mxu0 0.0
    %677 = vmatprep.subr.mxu0 0.0
    %678 = vmatpush2.xpose.msra.mxu0 0.0
    %679 = vmatprep.subr.mxu0 0.0
    %680 = vmatpush2.xpose.msra.mxu0 0.0
    %681 = vmatprep.mubr.f32.mxu0 0.0
    %682 = vmatmul.mubr.f32.gmra.mxu0 %v612
    %v683 = vpop.f32.mrf.mxu0
    %v684 = vadd.f32 0.0, %v683
    %v685 = vpop.f32.mrf.mxu0
    %686 = vdwg.mxu0
    %v687 = vmul.f32 %v152, 16.0
    %v688 = vmul.f32 %v228, 16.0
    %v689 = vmul.f32 %v304, 16.0
    %v690 = vmul.f32 %v380, 16.0
    %v691 = vmul.f32 %v456, 16.0
    %v692 = vmul.f32 %v532, 16.0
    %v693 = vmul.f32 %v608, 16.0
    %v694 = vmul.f32 %v684, 16.0
    %vm695 = vcmask 64512
    %v696 = vsel %vm695, %v687, -inf
    %697 = vmax.xlane.f32.xlu0 %v696
    %v698 = vpop.xlane.xlu0 %697
    %v699 = vsel %vm695, %v688, -inf
    %700 = vmax.xlane.f32.xlu0 %v699
    %v701 = vpop.xlane.xlu0 %700
    %v702 = vsel %vm695, %v689, -inf
    %703 = vmax.xlane.f32.xlu0 %v702
    %v704 = vpop.xlane.xlu0 %703
    %v705 = vsel %vm695, %v690, -inf
    %706 = vmax.xlane.f32.xlu0 %v705
    %v707 = vpop.xlane.xlu0 %706
    %v708 = vsel %vm695, %v691, -inf
    %709 = vmax.xlane.f32.xlu0 %v708
    %v710 = vpop.xlane.xlu0 %709
    %v711 = vsel %vm695, %v692, -inf
    %712 = vmax.xlane.f32.xlu0 %v711
    %v713 = vpop.xlane.xlu0 %712
    %v714 = vsel %vm695, %v693, -inf
    %715 = vmax.xlane.f32.xlu0 %v714
    %v716 = vpop.xlane.xlu0 %715
    %v717 = vsel %vm695, %v694, -inf
    %718 = vmax.xlane.f32.xlu0 %v717
    %v719 = vpop.xlane.xlu0 %718
    %v720 = vsub.f32 %v687, %v698
    %v721 = vsub.f32 %v688, %v701
    %v722 = vsub.f32 %v689, %v704
    %v723 = vsub.f32 %v690, %v707
    %v724 = vsub.f32 %v691, %v710
    %v725 = vsub.f32 %v692, %v713
    %v726 = vsub.f32 %v693, %v716
    %v727 = vsub.f32 %v694, %v719
    %v728 = vmul.f32 %v720, 1.442695
    %v729 = vpow.pop %v728
    %v730 = vmul.f32 %v721, 1.442695
    %v731 = vpow.pop %v730
    %v732 = vmul.f32 %v722, 1.442695
    %v733 = vpow.pop %v732
    %v734 = vmul.f32 %v723, 1.442695
    %v735 = vpow.pop %v734
    %v736 = vmul.f32 %v724, 1.442695
    %v737 = vpow.pop %v736
    %v738 = vmul.f32 %v725, 1.442695
    %v739 = vpow.pop %v738
    %v740 = vmul.f32 %v726, 1.442695
    %v741 = vpow.pop %v740
    %v742 = vmul.f32 %v727, 1.442695
    %v743 = vpow.pop %v742
    %v744 = vsel %vm695, %v729, 0.0
    %745 = vadd.xlane.f32.xlu0 %v744
    %v746 = vpop.xlane.xlu0 %745
    %v747 = vsel %vm695, %v731, 0.0
    %748 = vadd.xlane.f32.xlu0 %v747
    %v749 = vpop.xlane.xlu0 %748
    %v750 = vsel %vm695, %v733, 0.0
    %751 = vadd.xlane.f32.xlu0 %v750
    %v752 = vpop.xlane.xlu0 %751
    %v753 = vsel %vm695, %v735, 0.0
    %754 = vadd.xlane.f32.xlu0 %v753
    %v755 = vpop.xlane.xlu0 %754
    %v756 = vsel %vm695, %v737, 0.0
    %757 = vadd.xlane.f32.xlu0 %v756
    %v758 = vpop.xlane.xlu0 %757
    %v759 = vsel %vm695, %v739, 0.0
    %760 = vadd.xlane.f32.xlu0 %v759
    %v761 = vpop.xlane.xlu0 %760
    %v762 = vsel %vm695, %v741, 0.0
    %763 = vadd.xlane.f32.xlu0 %v762
    %v764 = vpop.xlane.xlu0 %763
    %v765 = vsel %vm695, %v743, 0.0
    %766 = vadd.xlane.f32.xlu0 %v765
    %v767 = vpop.xlane.xlu0 %766
    %vm768 = vcmp.ge.f32.partialorder %v70, 0.3
    %vm769 = vcmp.ge.f32.partialorder %v71, 0.3
    %vm770 = vcmp.ge.f32.partialorder %v72, 0.3
    %vm771 = vcmp.ge.f32.partialorder %v73, 0.3
    %vm772 = vcmp.ge.f32.partialorder %v74, 0.3
    %vm773 = vcmp.ge.f32.partialorder %v75, 0.3
    %vm774 = vcmp.ge.f32.partialorder %v76, 0.3
    %vm775 = vcmp.ge.f32.partialorder %v77, 0.3
    %v776 = vsel %vm768, %v729, 0.0
    %v777 = vsel %vm769, %v731, 0.0
    %v778 = vsel %vm770, %v733, 0.0
    %v779 = vsel %vm771, %v735, 0.0
    %v780 = vsel %vm772, %v737, 0.0
    %v781 = vsel %vm773, %v739, 0.0
    %v782 = vsel %vm774, %v741, 0.0
    %v783 = vsel %vm775, %v743, 0.0
    %v785 = vsel %vm695, %v776, 0
    %787 = vmatprep.subr.mxu0 0.0
    %788 = vmatpush1.msra.mxu0 0.0
    %789 = vmatprep.subr.mxu0 0.0
    %790 = vmatpush1.msra.mxu0 0.0
    %791 = vmatprep.subr.mxu0 0.0
    %792 = vmatpush1.msra.mxu0 0.0
    %793 = vmatprep.subr.mxu0 0.0
    %794 = vmatpush1.msra.mxu0 0.0
    %795 = vmatprep.subr.mxu0 0.0
    %796 = vmatpush1.msra.mxu0 0.0
    %797 = vmatprep.subr.mxu0 0.0
    %798 = vmatpush1.msra.mxu0 0.0
    %799 = vmatprep.subr.mxu0 0.0
    %800 = vmatpush1.msra.mxu0 0.0
    %801 = vmatprep.subr.mxu0 0.0
    %802 = vmatpush1.msra.mxu0 0.0
    %803 = vmatprep.subr.mxu0 0.0
    %804 = vmatpush1.msra.mxu0 0.0
    %805 = vmatprep.subr.mxu0 0.0
    %806 = vmatpush1.msra.mxu0 0.0
    %807 = vmatprep.subr.mxu0 0.0
    %808 = vmatpush1.msra.mxu0 0.0
    %809 = vmatprep.subr.mxu0 0.0
    %810 = vmatpush1.msra.mxu0 0.0
    %811 = vmatprep.subr.mxu0 0.0
    %812 = vmatpush1.msra.mxu0 0.0
    %813 = vmatprep.subr.mxu0 0.0
    %814 = vmatpush1.msra.mxu0 0.0
    %815 = vmatprep.subr.mxu0 0.0
    %816 = vmatpush1.msra.mxu0 0.0
    %817 = vmatprep.subr.mxu0 0.0
    %818 = vmatpush1.msra.mxu0 %v62
    %819 = vmatprep.subr.mxu0 0.0
    %820 = vmatpush2.msra.mxu0 0.0
    %821 = vmatprep.subr.mxu0 0.0
    %822 = vmatpush2.msra.mxu0 0.0
    %823 = vmatprep.subr.mxu0 0.0
    %824 = vmatpush2.msra.mxu0 0.0
    %825 = vmatprep.subr.mxu0 0.0
    %826 = vmatpush2.msra.mxu0 0.0
    %827 = vmatprep.subr.mxu0 0.0
    %828 = vmatpush2.msra.mxu0 0.0
    %829 = vmatprep.subr.mxu0 0.0
    %830 = vmatpush2.msra.mxu0 0.0
    %831 = vmatprep.subr.mxu0 0.0
    %832 = vmatpush2.msra.mxu0 0.0
    %833 = vmatprep.subr.mxu0 0.0
    %834 = vmatpush2.msra.mxu0 0.0
    %835 = vmatprep.subr.mxu0 0.0
    %836 = vmatpush2.msra.mxu0 0.0
    %837 = vmatprep.subr.mxu0 0.0
    %838 = vmatpush2.msra.mxu0 0.0
    %839 = vmatprep.subr.mxu0 0.0
    %840 = vmatpush2.msra.mxu0 0.0
    %841 = vmatprep.subr.mxu0 0.0
    %842 = vmatpush2.msra.mxu0 0.0
    %843 = vmatprep.subr.mxu0 0.0
    %844 = vmatpush2.msra.mxu0 0.0
    %845 = vmatprep.subr.mxu0 0.0
    %846 = vmatpush2.msra.mxu0 0.0
    %847 = vmatprep.subr.mxu0 0.0
    %848 = vmatpush2.msra.mxu0 0.0
    %849 = vmatprep.subr.mxu0 0.0
    %850 = vmatpush2.msra.mxu0 0.0
    %851 = vmatprep.mubr.f32.mxu0 0.0
    %852 = vmatmul.mubr.f32.gmra.mxu0 %v785
    %v853 = vpop.f32.mrf.mxu0
    %v854 = vadd.f32 0.0, %v853
    %v855 = vpop.f32.mrf.mxu0
    %856 = vdwg.mxu0
    %v858 = vsel %vm695, %v777, 0
    %860 = vmatprep.subr.mxu0 0.0
    %861 = vmatpush1.msra.mxu0 0.0
    %862 = vmatprep.subr.mxu0 0.0
    %863 = vmatpush1.msra.mxu0 0.0
    %864 = vmatprep.subr.mxu0 0.0
    %865 = vmatpush1.msra.mxu0 0.0
    %866 = vmatprep.subr.mxu0 0.0
    %867 = vmatpush1.msra.mxu0 0.0
    %868 = vmatprep.subr.mxu0 0.0
    %869 = vmatpush1.msra.mxu0 0.0
    %870 = vmatprep.subr.mxu0 0.0
    %871 = vmatpush1.msra.mxu0 0.0
    %872 = vmatprep.subr.mxu0 0.0
    %873 = vmatpush1.msra.mxu0 0.0
    %874 = vmatprep.subr.mxu0 0.0
    %875 = vmatpush1.msra.mxu0 0.0
    %876 = vmatprep.subr.mxu0 0.0
    %877 = vmatpush1.msra.mxu0 0.0
    %878 = vmatprep.subr.mxu0 0.0
    %879 = vmatpush1.msra.mxu0 0.0
    %880 = vmatprep.subr.mxu0 0.0
    %881 = vmatpush1.msra.mxu0 0.0
    %882 = vmatprep.subr.mxu0 0.0
    %883 = vmatpush1.msra.mxu0 0.0
    %884 = vmatprep.subr.mxu0 0.0
    %885 = vmatpush1.msra.mxu0 0.0
    %886 = vmatprep.subr.mxu0 0.0
    %887 = vmatpush1.msra.mxu0 0.0
    %888 = vmatprep.subr.mxu0 0.0
    %889 = vmatpush1.msra.mxu0 0.0
    %890 = vmatprep.subr.mxu0 0.0
    %891 = vmatpush1.msra.mxu0 %v63
    %892 = vmatprep.subr.mxu0 0.0
    %893 = vmatpush2.msra.mxu0 0.0
    %894 = vmatprep.subr.mxu0 0.0
    %895 = vmatpush2.msra.mxu0 0.0
    %896 = vmatprep.subr.mxu0 0.0
    %897 = vmatpush2.msra.mxu0 0.0
    %898 = vmatprep.subr.mxu0 0.0
    %899 = vmatpush2.msra.mxu0 0.0
    %900 = vmatprep.subr.mxu0 0.0
    %901 = vmatpush2.msra.mxu0 0.0
    %902 = vmatprep.subr.mxu0 0.0
    %903 = vmatpush2.msra.mxu0 0.0
    %904 = vmatprep.subr.mxu0 0.0
    %905 = vmatpush2.msra.mxu0 0.0
    %906 = vmatprep.subr.mxu0 0.0
    %907 = vmatpush2.msra.mxu0 0.0
    %908 = vmatprep.subr.mxu0 0.0
    %909 = vmatpush2.msra.mxu0 0.0
    %910 = vmatprep.subr.mxu0 0.0
    %911 = vmatpush2.msra.mxu0 0.0
    %912 = vmatprep.subr.mxu0 0.0
    %913 = vmatpush2.msra.mxu0 0.0
    %914 = vmatprep.subr.mxu0 0.0
    %915 = vmatpush2.msra.mxu0 0.0
    %916 = vmatprep.subr.mxu0 0.0
    %917 = vmatpush2.msra.mxu0 0.0
    %918 = vmatprep.subr.mxu0 0.0
    %919 = vmatpush2.msra.mxu0 0.0
    %920 = vmatprep.subr.mxu0 0.0
    %921 = vmatpush2.msra.mxu0 0.0
    %922 = vmatprep.subr.mxu0 0.0
    %923 = vmatpush2.msra.mxu0 0.0
    %924 = vmatprep.mubr.f32.mxu0 0.0
    %925 = vmatmul.mubr.f32.gmra.mxu0 %v858
    %v926 = vpop.f32.mrf.mxu0
    %v927 = vadd.f32 0.0, %v926
    %v928 = vpop.f32.mrf.mxu0
    %929 = vdwg.mxu0
    %v931 = vsel %vm695, %v778, 0
    %933 = vmatprep.subr.mxu0 0.0
    %934 = vmatpush1.msra.mxu0 0.0
    %935 = vmatprep.subr.mxu0 0.0
    %936 = vmatpush1.msra.mxu0 0.0
    %937 = vmatprep.subr.mxu0 0.0
    %938 = vmatpush1.msra.mxu0 0.0
    %939 = vmatprep.subr.mxu0 0.0
    %940 = vmatpush1.msra.mxu0 0.0
    %941 = vmatprep.subr.mxu0 0.0
    %942 = vmatpush1.msra.mxu0 0.0
    %943 = vmatprep.subr.mxu0 0.0
    %944 = vmatpush1.msra.mxu0 0.0
    %945 = vmatprep.subr.mxu0 0.0
    %946 = vmatpush1.msra.mxu0 0.0
    %947 = vmatprep.subr.mxu0 0.0
    %948 = vmatpush1.msra.mxu0 0.0
    %949 = vmatprep.subr.mxu0 0.0
    %950 = vmatpush1.msra.mxu0 0.0
    %951 = vmatprep.subr.mxu0 0.0
    %952 = vmatpush1.msra.mxu0 0.0
    %953 = vmatprep.subr.mxu0 0.0
    %954 = vmatpush1.msra.mxu0 0.0
    %955 = vmatprep.subr.mxu0 0.0
    %956 = vmatpush1.msra.mxu0 0.0
    %957 = vmatprep.subr.mxu0 0.0
    %958 = vmatpush1.msra.mxu0 0.0
    %959 = vmatprep.subr.mxu0 0.0
    %960 = vmatpush1.msra.mxu0 0.0
    %961 = vmatprep.subr.mxu0 0.0
    %962 = vmatpush1.msra.mxu0 0.0
    %963 = vmatprep.subr.mxu0 0.0
    %964 = vmatpush1.msra.mxu0 %v64
    %965 = vmatprep.subr.mxu0 0.0
    %966 = vmatpush2.msra.mxu0 0.0
    %967 = vmatprep.subr.mxu0 0.0
    %968 = vmatpush2.msra.mxu0 0.0
    %969 = vmatprep.subr.mxu0 0.0
    %970 = vmatpush2.msra.mxu0 0.0
    %971 = vmatprep.subr.mxu0 0.0
    %972 = vmatpush2.msra.mxu0 0.0
    %973 = vmatprep.subr.mxu0 0.0
    %974 = vmatpush2.msra.mxu0 0.0
    %975 = vmatprep.subr.mxu0 0.0
    %976 = vmatpush2.msra.mxu0 0.0
    %977 = vmatprep.subr.mxu0 0.0
    %978 = vmatpush2.msra.mxu0 0.0
    %979 = vmatprep.subr.mxu0 0.0
    %980 = vmatpush2.msra.mxu0 0.0
    %981 = vmatprep.subr.mxu0 0.0
    %982 = vmatpush2.msra.mxu0 0.0
    %983 = vmatprep.subr.mxu0 0.0
    %984 = vmatpush2.msra.mxu0 0.0
    %985 = vmatprep.subr.mxu0 0.0
    %986 = vmatpush2.msra.mxu0 0.0
    %987 = vmatprep.subr.mxu0 0.0
    %988 = vmatpush2.msra.mxu0 0.0
    %989 = vmatprep.subr.mxu0 0.0
    %990 = vmatpush2.msra.mxu0 0.0
    %991 = vmatprep.subr.mxu0 0.0
    %992 = vmatpush2.msra.mxu0 0.0
    %993 = vmatprep.subr.mxu0 0.0
    %994 = vmatpush2.msra.mxu0 0.0
    %995 = vmatprep.subr.mxu0 0.0
    %996 = vmatpush2.msra.mxu0 0.0
    %997 = vmatprep.mubr.f32.mxu0 0.0
    %998 = vmatmul.mubr.f32.gmra.mxu0 %v931
    %v999 = vpop.f32.mrf.mxu0
    %v1000 = vadd.f32 0.0, %v999
    %v1001 = vpop.f32.mrf.mxu0
    %1002 = vdwg.mxu0
    %v1004 = vsel %vm695, %v779, 0
    %1006 = vmatprep.subr.mxu0 0.0
    %1007 = vmatpush1.msra.mxu0 0.0
    %1008 = vmatprep.subr.mxu0 0.0
    %1009 = vmatpush1.msra.mxu0 0.0
    %1010 = vmatprep.subr.mxu0 0.0
    %1011 = vmatpush1.msra.mxu0 0.0
    %1012 = vmatprep.subr.mxu0 0.0
    %1013 = vmatpush1.msra.mxu0 0.0
    %1014 = vmatprep.subr.mxu0 0.0
    %1015 = vmatpush1.msra.mxu0 0.0
    %1016 = vmatprep.subr.mxu0 0.0
    %1017 = vmatpush1.msra.mxu0 0.0
    %1018 = vmatprep.subr.mxu0 0.0
    %1019 = vmatpush1.msra.mxu0 0.0
    %1020 = vmatprep.subr.mxu0 0.0
    %1021 = vmatpush1.msra.mxu0 0.0
    %1022 = vmatprep.subr.mxu0 0.0
    %1023 = vmatpush1.msra.mxu0 0.0
    %1024 = vmatprep.subr.mxu0 0.0
    %1025 = vmatpush1.msra.mxu0 0.0
    %1026 = vmatprep.subr.mxu0 0.0
    %1027 = vmatpush1.msra.mxu0 0.0
    %1028 = vmatprep.subr.mxu0 0.0
    %1029 = vmatpush1.msra.mxu0 0.0
    %1030 = vmatprep.subr.mxu0 0.0
    %1031 = vmatpush1.msra.mxu0 0.0
    %1032 = vmatprep.subr.mxu0 0.0
    %1033 = vmatpush1.msra.mxu0 0.0
    %1034 = vmatprep.subr.mxu0 0.0
    %1035 = vmatpush1.msra.mxu0 0.0
    %1036 = vmatprep.subr.mxu0 0.0
    %1037 = vmatpush1.msra.mxu0 %v65
    %1038 = vmatprep.subr.mxu0 0.0
    %1039 = vmatpush2.msra.mxu0 0.0
    %1040 = vmatprep.subr.mxu0 0.0
    %1041 = vmatpush2.msra.mxu0 0.0
    %1042 = vmatprep.subr.mxu0 0.0
    %1043 = vmatpush2.msra.mxu0 0.0
    %1044 = vmatprep.subr.mxu0 0.0
    %1045 = vmatpush2.msra.mxu0 0.0
    %1046 = vmatprep.subr.mxu0 0.0
    %1047 = vmatpush2.msra.mxu0 0.0
    %1048 = vmatprep.subr.mxu0 0.0
    %1049 = vmatpush2.msra.mxu0 0.0
    %1050 = vmatprep.subr.mxu0 0.0
    %1051 = vmatpush2.msra.mxu0 0.0
    %1052 = vmatprep.subr.mxu0 0.0
    %1053 = vmatpush2.msra.mxu0 0.0
    %1054 = vmatprep.subr.mxu0 0.0
    %1055 = vmatpush2.msra.mxu0 0.0
    %1056 = vmatprep.subr.mxu0 0.0
    %1057 = vmatpush2.msra.mxu0 0.0
    %1058 = vmatprep.subr.mxu0 0.0
    %1059 = vmatpush2.msra.mxu0 0.0
    %1060 = vmatprep.subr.mxu0 0.0
    %1061 = vmatpush2.msra.mxu0 0.0
    %1062 = vmatprep.subr.mxu0 0.0
    %1063 = vmatpush2.msra.mxu0 0.0
    %1064 = vmatprep.subr.mxu0 0.0
    %1065 = vmatpush2.msra.mxu0 0.0
    %1066 = vmatprep.subr.mxu0 0.0
    %1067 = vmatpush2.msra.mxu0 0.0
    %1068 = vmatprep.subr.mxu0 0.0
    %1069 = vmatpush2.msra.mxu0 0.0
    %1070 = vmatprep.mubr.f32.mxu0 0.0
    %1071 = vmatmul.mubr.f32.gmra.mxu0 %v1004
    %v1072 = vpop.f32.mrf.mxu0
    %v1073 = vadd.f32 0.0, %v1072
    %v1074 = vpop.f32.mrf.mxu0
    %1075 = vdwg.mxu0
    %v1077 = vsel %vm695, %v780, 0
    %1079 = vmatprep.subr.mxu0 0.0
    %1080 = vmatpush1.msra.mxu0 0.0
    %1081 = vmatprep.subr.mxu0 0.0
    %1082 = vmatpush1.msra.mxu0 0.0
    %1083 = vmatprep.subr.mxu0 0.0
    %1084 = vmatpush1.msra.mxu0 0.0
    %1085 = vmatprep.subr.mxu0 0.0
    %1086 = vmatpush1.msra.mxu0 0.0
    %1087 = vmatprep.subr.mxu0 0.0
    %1088 = vmatpush1.msra.mxu0 0.0
    %1089 = vmatprep.subr.mxu0 0.0
    %1090 = vmatpush1.msra.mxu0 0.0
    %1091 = vmatprep.subr.mxu0 0.0
    %1092 = vmatpush1.msra.mxu0 0.0
    %1093 = vmatprep.subr.mxu0 0.0
    %1094 = vmatpush1.msra.mxu0 0.0
    %1095 = vmatprep.subr.mxu0 0.0
    %1096 = vmatpush1.msra.mxu0 0.0
    %1097 = vmatprep.subr.mxu0 0.0
    %1098 = vmatpush1.msra.mxu0 0.0
    %1099 = vmatprep.subr.mxu0 0.0
    %1100 = vmatpush1.msra.mxu0 0.0
    %1101 = vmatprep.subr.mxu0 0.0
    %1102 = vmatpush1.msra.mxu0 0.0
    %1103 = vmatprep.subr.mxu0 0.0
    %1104 = vmatpush1.msra.mxu0 0.0
    %1105 = vmatprep.subr.mxu0 0.0
    %1106 = vmatpush1.msra.mxu0 0.0
    %1107 = vmatprep.subr.mxu0 0.0
    %1108 = vmatpush1.msra.mxu0 0.0
    %1109 = vmatprep.subr.mxu0 0.0
    %1110 = vmatpush1.msra.mxu0 %v66
    %1111 = vmatprep.subr.mxu0 0.0
    %1112 = vmatpush2.msra.mxu0 0.0
    %1113 = vmatprep.subr.mxu0 0.0
    %1114 = vmatpush2.msra.mxu0 0.0
    %1115 = vmatprep.subr.mxu0 0.0
    %1116 = vmatpush2.msra.mxu0 0.0
    %1117 = vmatprep.subr.mxu0 0.0
    %1118 = vmatpush2.msra.mxu0 0.0
    %1119 = vmatprep.subr.mxu0 0.0
    %1120 = vmatpush2.msra.mxu0 0.0
    %1121 = vmatprep.subr.mxu0 0.0
    %1122 = vmatpush2.msra.mxu0 0.0
    %1123 = vmatprep.subr.mxu0 0.0
    %1124 = vmatpush2.msra.mxu0 0.0
    %1125 = vmatprep.subr.mxu0 0.0
    %1126 = vmatpush2.msra.mxu0 0.0
    %1127 = vmatprep.subr.mxu0 0.0
    %1128 = vmatpush2.msra.mxu0 0.0
    %1129 = vmatprep.subr.mxu0 0.0
    %1130 = vmatpush2.msra.mxu0 0.0
    %1131 = vmatprep.subr.mxu0 0.0
    %1132 = vmatpush2.msra.mxu0 0.0
    %1133 = vmatprep.subr.mxu0 0.0
    %1134 = vmatpush2.msra.mxu0 0.0
    %1135 = vmatprep.subr.mxu0 0.0
    %1136 = vmatpush2.msra.mxu0 0.0
    %1137 = vmatprep.subr.mxu0 0.0
    %1138 = vmatpush2.msra.mxu0 0.0
    %1139 = vmatprep.subr.mxu0 0.0
    %1140 = vmatpush2.msra.mxu0 0.0
    %1141 = vmatprep.subr.mxu0 0.0
    %1142 = vmatpush2.msra.mxu0 0.0
    %1143 = vmatprep.mubr.f32.mxu0 0.0
    %1144 = vmatmul.mubr.f32.gmra.mxu0 %v1077
    %v1145 = vpop.f32.mrf.mxu0
    %v1146 = vadd.f32 0.0, %v1145
    %v1147 = vpop.f32.mrf.mxu0
    %1148 = vdwg.mxu0
    %v1150 = vsel %vm695, %v781, 0
    %1152 = vmatprep.subr.mxu0 0.0
    %1153 = vmatpush1.msra.mxu0 0.0
    %1154 = vmatprep.subr.mxu0 0.0
    %1155 = vmatpush1.msra.mxu0 0.0
    %1156 = vmatprep.subr.mxu0 0.0
    %1157 = vmatpush1.msra.mxu0 0.0
    %1158 = vmatprep.subr.mxu0 0.0
    %1159 = vmatpush1.msra.mxu0 0.0
    %1160 = vmatprep.subr.mxu0 0.0
    %1161 = vmatpush1.msra.mxu0 0.0
    %1162 = vmatprep.subr.mxu0 0.0
    %1163 = vmatpush1.msra.mxu0 0.0
    %1164 = vmatprep.subr.mxu0 0.0
    %1165 = vmatpush1.msra.mxu0 0.0
    %1166 = vmatprep.subr.mxu0 0.0
    %1167 = vmatpush1.msra.mxu0 0.0
    %1168 = vmatprep.subr.mxu0 0.0
    %1169 = vmatpush1.msra.mxu0 0.0
    %1170 = vmatprep.subr.mxu0 0.0
    %1171 = vmatpush1.msra.mxu0 0.0
    %1172 = vmatprep.subr.mxu0 0.0
    %1173 = vmatpush1.msra.mxu0 0.0
    %1174 = vmatprep.subr.mxu0 0.0
    %1175 = vmatpush1.msra.mxu0 0.0
    %1176 = vmatprep.subr.mxu0 0.0
    %1177 = vmatpush1.msra.mxu0 0.0
    %1178 = vmatprep.subr.mxu0 0.0
    %1179 = vmatpush1.msra.mxu0 0.0
    %1180 = vmatprep.subr.mxu0 0.0
    %1181 = vmatpush1.msra.mxu0 0.0
    %1182 = vmatprep.subr.mxu0 0.0
    %1183 = vmatpush1.msra.mxu0 %v67
    %1184 = vmatprep.subr.mxu0 0.0
    %1185 = vmatpush2.msra.mxu0 0.0
    %1186 = vmatprep.subr.mxu0 0.0
    %1187 = vmatpush2.msra.mxu0 0.0
    %1188 = vmatprep.subr.mxu0 0.0
    %1189 = vmatpush2.msra.mxu0 0.0
    %1190 = vmatprep.subr.mxu0 0.0
    %1191 = vmatpush2.msra.mxu0 0.0
    %1192 = vmatprep.subr.mxu0 0.0
    %1193 = vmatpush2.msra.mxu0 0.0
    %1194 = vmatprep.subr.mxu0 0.0
    %1195 = vmatpush2.msra.mxu0 0.0
    %1196 = vmatprep.subr.mxu0 0.0
    %1197 = vmatpush2.msra.mxu0 0.0
    %1198 = vmatprep.subr.mxu0 0.0
    %1199 = vmatpush2.msra.mxu0 0.0
    %1200 = vmatprep.subr.mxu0 0.0
    %1201 = vmatpush2.msra.mxu0 0.0
    %1202 = vmatprep.subr.mxu0 0.0
    %1203 = vmatpush2.msra.mxu0 0.0
    %1204 = vmatprep.subr.mxu0 0.0
    %1205 = vmatpush2.msra.mxu0 0.0
    %1206 = vmatprep.subr.mxu0 0.0
    %1207 = vmatpush2.msra.mxu0 0.0
    %1208 = vmatprep.subr.mxu0 0.0
    %1209 = vmatpush2.msra.mxu0 0.0
    %1210 = vmatprep.subr.mxu0 0.0
    %1211 = vmatpush2.msra.mxu0 0.0
    %1212 = vmatprep.subr.mxu0 0.0
    %1213 = vmatpush2.msra.mxu0 0.0
    %1214 = vmatprep.subr.mxu0 0.0
    %1215 = vmatpush2.msra.mxu0 0.0
    %1216 = vmatprep.mubr.f32.mxu0 0.0
    %1217 = vmatmul.mubr.f32.gmra.mxu0 %v1150
    %v1218 = vpop.f32.mrf.mxu0
    %v1219 = vadd.f32 0.0, %v1218
    %v1220 = vpop.f32.mrf.mxu0
    %1221 = vdwg.mxu0
    %v1223 = vsel %vm695, %v782, 0
    %1225 = vmatprep.subr.mxu0 0.0
    %1226 = vmatpush1.msra.mxu0 0.0
    %1227 = vmatprep.subr.mxu0 0.0
    %1228 = vmatpush1.msra.mxu0 0.0
    %1229 = vmatprep.subr.mxu0 0.0
    %1230 = vmatpush1.msra.mxu0 0.0
    %1231 = vmatprep.subr.mxu0 0.0
    %1232 = vmatpush1.msra.mxu0 0.0
    %1233 = vmatprep.subr.mxu0 0.0
    %1234 = vmatpush1.msra.mxu0 0.0
    %1235 = vmatprep.subr.mxu0 0.0
    %1236 = vmatpush1.msra.mxu0 0.0
    %1237 = vmatprep.subr.mxu0 0.0
    %1238 = vmatpush1.msra.mxu0 0.0
    %1239 = vmatprep.subr.mxu0 0.0
    %1240 = vmatpush1.msra.mxu0 0.0
    %1241 = vmatprep.subr.mxu0 0.0
    %1242 = vmatpush1.msra.mxu0 0.0
    %1243 = vmatprep.subr.mxu0 0.0
    %1244 = vmatpush1.msra.mxu0 0.0
    %1245 = vmatprep.subr.mxu0 0.0
    %1246 = vmatpush1.msra.mxu0 0.0
    %1247 = vmatprep.subr.mxu0 0.0
    %1248 = vmatpush1.msra.mxu0 0.0
    %1249 = vmatprep.subr.mxu0 0.0
    %1250 = vmatpush1.msra.mxu0 0.0
    %1251 = vmatprep.subr.mxu0 0.0
    %1252 = vmatpush1.msra.mxu0 0.0
    %1253 = vmatprep.subr.mxu0 0.0
    %1254 = vmatpush1.msra.mxu0 0.0
    %1255 = vmatprep.subr.mxu0 0.0
    %1256 = vmatpush1.msra.mxu0 %v68
    %1257 = vmatprep.subr.mxu0 0.0
    %1258 = vmatpush2.msra.mxu0 0.0
    %1259 = vmatprep.subr.mxu0 0.0
    %1260 = vmatpush2.msra.mxu0 0.0
    %1261 = vmatprep.subr.mxu0 0.0
    %1262 = vmatpush2.msra.mxu0 0.0
    %1263 = vmatprep.subr.mxu0 0.0
    %1264 = vmatpush2.msra.mxu0 0.0
    %1265 = vmatprep.subr.mxu0 0.0
    %1266 = vmatpush2.msra.mxu0 0.0
    %1267 = vmatprep.subr.mxu0 0.0
    %1268 = vmatpush2.msra.mxu0 0.0
    %1269 = vmatprep.subr.mxu0 0.0
    %1270 = vmatpush2.msra.mxu0 0.0
    %1271 = vmatprep.subr.mxu0 0.0
    %1272 = vmatpush2.msra.mxu0 0.0
    %1273 = vmatprep.subr.mxu0 0.0
    %1274 = vmatpush2.msra.mxu0 0.0
    %1275 = vmatprep.subr.mxu0 0.0
    %1276 = vmatpush2.msra.mxu0 0.0
    %1277 = vmatprep.subr.mxu0 0.0
    %1278 = vmatpush2.msra.mxu0 0.0
    %1279 = vmatprep.subr.mxu0 0.0
    %1280 = vmatpush2.msra.mxu0 0.0
    %1281 = vmatprep.subr.mxu0 0.0
    %1282 = vmatpush2.msra.mxu0 0.0
    %1283 = vmatprep.subr.mxu0 0.0
    %1284 = vmatpush2.msra.mxu0 0.0
    %1285 = vmatprep.subr.mxu0 0.0
    %1286 = vmatpush2.msra.mxu0 0.0
    %1287 = vmatprep.subr.mxu0 0.0
    %1288 = vmatpush2.msra.mxu0 0.0
    %1289 = vmatprep.mubr.f32.mxu0 0.0
    %1290 = vmatmul.mubr.f32.gmra.mxu0 %v1223
    %v1291 = vpop.f32.mrf.mxu0
    %v1292 = vadd.f32 0.0, %v1291
    %v1293 = vpop.f32.mrf.mxu0
    %1294 = vdwg.mxu0
    %v1296 = vsel %vm695, %v783, 0
    %1298 = vmatprep.subr.mxu0 0.0
    %1299 = vmatpush1.msra.mxu0 0.0
    %1300 = vmatprep.subr.mxu0 0.0
    %1301 = vmatpush1.msra.mxu0 0.0
    %1302 = vmatprep.subr.mxu0 0.0
    %1303 = vmatpush1.msra.mxu0 0.0
    %1304 = vmatprep.subr.mxu0 0.0
    %1305 = vmatpush1.msra.mxu0 0.0
    %1306 = vmatprep.subr.mxu0 0.0
    %1307 = vmatpush1.msra.mxu0 0.0
    %1308 = vmatprep.subr.mxu0 0.0
    %1309 = vmatpush1.msra.mxu0 0.0
    %1310 = vmatprep.subr.mxu0 0.0
    %1311 = vmatpush1.msra.mxu0 0.0
    %1312 = vmatprep.subr.mxu0 0.0
    %1313 = vmatpush1.msra.mxu0 0.0
    %1314 = vmatprep.subr.mxu0 0.0
    %1315 = vmatpush1.msra.mxu0 0.0
    %1316 = vmatprep.subr.mxu0 0.0
    %1317 = vmatpush1.msra.mxu0 0.0
    %1318 = vmatprep.subr.mxu0 0.0
    %1319 = vmatpush1.msra.mxu0 0.0
    %1320 = vmatprep.subr.mxu0 0.0
    %1321 = vmatpush1.msra.mxu0 0.0
    %1322 = vmatprep.subr.mxu0 0.0
    %1323 = vmatpush1.msra.mxu0 0.0
    %1324 = vmatprep.subr.mxu0 0.0
    %1325 = vmatpush1.msra.mxu0 0.0
    %1326 = vmatprep.subr.mxu0 0.0
    %1327 = vmatpush1.msra.mxu0 0.0
    %1328 = vmatprep.subr.mxu0 0.0
    %1329 = vmatpush1.msra.mxu0 %v69
    %1330 = vmatprep.subr.mxu0 0.0
    %1331 = vmatpush2.msra.mxu0 0.0
    %1332 = vmatprep.subr.mxu0 0.0
    %1333 = vmatpush2.msra.mxu0 0.0
    %1334 = vmatprep.subr.mxu0 0.0
    %1335 = vmatpush2.msra.mxu0 0.0
    %1336 = vmatprep.subr.mxu0 0.0
    %1337 = vmatpush2.msra.mxu0 0.0
    %1338 = vmatprep.subr.mxu0 0.0
    %1339 = vmatpush2.msra.mxu0 0.0
    %1340 = vmatprep.subr.mxu0 0.0
    %1341 = vmatpush2.msra.mxu0 0.0
    %1342 = vmatprep.subr.mxu0 0.0
    %1343 = vmatpush2.msra.mxu0 0.0
    %1344 = vmatprep.subr.mxu0 0.0
    %1345 = vmatpush2.msra.mxu0 0.0
    %1346 = vmatprep.subr.mxu0 0.0
    %1347 = vmatpush2.msra.mxu0 0.0
    %1348 = vmatprep.subr.mxu0 0.0
    %1349 = vmatpush2.msra.mxu0 0.0
    %1350 = vmatprep.subr.mxu0 0.0
    %1351 = vmatpush2.msra.mxu0 0.0
    %1352 = vmatprep.subr.mxu0 0.0
    %1353 = vmatpush2.msra.mxu0 0.0
    %1354 = vmatprep.subr.mxu0 0.0
    %1355 = vmatpush2.msra.mxu0 0.0
    %1356 = vmatprep.subr.mxu0 0.0
    %1357 = vmatpush2.msra.mxu0 0.0
    %1358 = vmatprep.subr.mxu0 0.0
    %1359 = vmatpush2.msra.mxu0 0.0
    %1360 = vmatprep.subr.mxu0 0.0
    %1361 = vmatpush2.msra.mxu0 0.0
    %1362 = vmatprep.mubr.f32.mxu0 0.0
    %1363 = vmatmul.mubr.f32.gmra.mxu0 %v1296
    %v1364 = vpop.f32.mrf.mxu0
    %v1365 = vadd.f32 0.0, %v1364
    %v1366 = vpop.f32.mrf.mxu0
    %1367 = vdwg.mxu0
    %v1368 = vrcp.pop %v746
    %v1369 = vmul.f32 1.4285715, %v1368
    %v1370 = vrcp.pop %v749
    %v1371 = vmul.f32 1.4285715, %v1370
    %v1372 = vrcp.pop %v752
    %v1373 = vmul.f32 1.4285715, %v1372
    %v1374 = vrcp.pop %v755
    %v1375 = vmul.f32 1.4285715, %v1374
    %v1376 = vrcp.pop %v758
    %v1377 = vmul.f32 1.4285715, %v1376
    %v1378 = vrcp.pop %v761
    %v1379 = vmul.f32 1.4285715, %v1378
    %v1380 = vrcp.pop %v764
    %v1381 = vmul.f32 1.4285715, %v1380
    %v1382 = vrcp.pop %v767
    %v1383 = vmul.f32 1.4285715, %v1382
    %v1384 = vmul.f32 %v854, %v1369
    %v1385 = vmul.f32 %v927, %v1371
    %v1386 = vmul.f32 %v1000, %v1373
    %v1387 = vmul.f32 %v1073, %v1375
    %v1388 = vmul.f32 %v1146, %v1377
    %v1389 = vmul.f32 %v1219, %v1379
    %v1390 = vmul.f32 %v1292, %v1381
    %v1391 = vmul.f32 %v1365, %v1383
    %1392 = vst.msk [vmem:[#allocation7] sm:$0xff] %vm78, %v1384
    %1393 = vst.msk [vmem:[#allocation7 + $0x8] sm:$0xff] %vm78, %v1385
    %1394 = vst.msk [vmem:[#allocation7 + $0x10] sm:$0xff] %vm78, %v1386
    %1395 = vst.msk [vmem:[#allocation7 + $0x18] sm:$0xff] %vm78, %v1387
    %1396 = vst.msk [vmem:[#allocation7 + $0x20] sm:$0xff] %vm78, %v1388
    %1397 = vst.msk [vmem:[#allocation7 + $0x28] sm:$0xff] %vm78, %v1389
    %1398 = vst.msk [vmem:[#allocation7 + $0x30] sm:$0xff] %vm78, %v1390
    %1399 = vst.msk [vmem:[#allocation7 + $0x38] sm:$0xff] %vm78, %v1391
    // Predicated region
    $region26: #{sdpa_dropout.1} parent=1 // pred_check
      _
    $region27: #{sdpa_dropout.1} parent=1 // pred_check_branch
      %1401 = sbr.rel (0) target = $region29
    $region28: #{sdpa_dropout.1} parent=1 // pred_region
      %s1403 = ssub.s32 1024, 1024
      %1404 = vsyncadd [#allocation4], %s1403
      %s1405 = sshll.u32 [#allocation7], 4
      %s1406 = int_to_ptr.vmem [resolvable:$true] %s1405
      %1411 = dma.vmem_to_hbm [thread:$0]  %s1406, 1024, %s4, [#allocation4], 128, 128, 8
    $region29: #{sdpa_dropout.1} parent=1 // pred_fallthru
      _
    // Predicated region
    $region30: #{sdpa_dropout.1} parent=1 // pred_check
      _
    $region31: #{sdpa_dropout.1} parent=1 // pred_check_branch
      %1413 = sbr.rel (0) target = $region33
    $region32: #{sdpa_dropout.1} parent=1 // pred_region
      %1414 = dma.done [#allocation4], 1024
    $region33: #{sdpa_dropout.1} parent=1 // pred_fallthru
      _
    %1415 = vsyncpa [#allocation3], 1
    %1416 = vsyncpa [#allocation6], 1
    %1417 = vsyncpa [#allocation4], 1

</llo_original>
